<compile_context>
chip_gen: v7x
topology: tpu7x:2x2x1
jax: 0.10.0
libtpu: 0.0.40
codegen_flags: <defaults>
</compile_context>

<pallas_src>
import jax
import jax.numpy as jnp
from jax.experimental import pallas as pl
from jax.experimental.pallas import tpu as pltpu

LANES = 128


def sdf_volume_kernel(params_ref, pts_ref, deltas_ref, dens_ref, feat_ref):
    # params_ref (SMEM, (9,)): [radius, alpha, inv_beta, cx, cy, cz, fr, fg, fb]
    radius = params_ref[0]
    alpha = params_ref[1]
    inv_beta = params_ref[2]

    # Dense (block_rows, 128) planes per channel.
    dx = pts_ref[0] - params_ref[3]
    dy = pts_ref[1] - params_ref[4]
    dz = pts_ref[2] - params_ref[5]

    # SphereSDF: ||p - c|| - r
    sd = jnp.sqrt(dx * dx + dy * dy + dz * dz) - radius

    # _sdf_to_density (Laplace CDF): both branches share e = exp(-|sd| / beta),
    # so only one exp per point; scale by precomputed 1/beta instead of dividing.
    e = jnp.exp(-jnp.abs(sd) * inv_beta)
    density = alpha * jnp.where(sd > 0.0, 0.5 * e, 1.0 - 0.5 * e)

    # out['density'] = -log(1 - density) / deltas   (precise reciprocal + multiply;
    # approx=True skipped to stay within 1e-5 of the exact-division reference and
    # keep the 1e10 sentinel delta behaving like the PyTorch module)
    dens_ref[...] = -jnp.log(1.0 - density) * pl.reciprocal(deltas_ref[...])

    # rainbow feature: clamp(|p - c|, 0.02, 0.98) * feature_param  (per channel)
    feat_ref[0] = jnp.clip(jnp.abs(dx), 0.02, 0.98) * params_ref[6]
    feat_ref[1] = jnp.clip(jnp.abs(dy), 0.02, 0.98) * params_ref[7]
    feat_ref[2] = jnp.clip(jnp.abs(dz), 0.02, 0.98) * params_ref[8]


def _pick_block_rows(nr, block_rows):
    max_rows = max(8, (block_rows // 8) * 8)
    if nr <= max_rows:
        return nr                        # whole sample axis in one block
    for cand in range(max_rows, 7, -8):  # largest multiple of 8 dividing nr
        if nr % cand == 0:
            return cand
    return nr                            # fallback: single full-extent block


def sdf_volume_forward(sample_points, sample_lengths,
                       center, radius, alpha, beta, feature, *, block_rows=32):
    """sample_points: (R, S, 3); sample_lengths: (R, S, 1).
    Returns {'density': (N, 1), 'feature': (N, 3)} with N = R * S."""
    R, S, _ = sample_points.shape
    N = R * S
    assert N % LANES == 0, "N must be a multiple of 128"
    nr = N // LANES
    br = _pick_block_rows(nr, block_rows)
    grid = (nr // br,)

    # Points to channel-major dense planes: (N, 3) -> (3, N) -> (3, Nr, 128).
    # (This transpose is the single unavoidable layout change.)
    pts = sample_points.reshape(N, 3).T.reshape(3, nr, LANES).astype(jnp.float32)

    # Deltas straight into the (Nr, 128) layout: free reshape, no transpose.
    depth = sample_lengths[..., 0]                                   # (R, S)
    deltas = jnp.concatenate(
        [depth[:, 1:] - depth[:, :-1],
         1e10 * jnp.ones_like(depth[:, :1])], axis=-1)               # (R, S)
    deltas = deltas.reshape(nr, LANES).astype(jnp.float32)

    # All scalars in one SMEM vector (no (3,1) VMEM micro-tiles).
    params = jnp.concatenate([
        jnp.array([radius, alpha, 1.0 / beta], dtype=jnp.float32),
        jnp.asarray(center, jnp.float32).reshape(3),
        jnp.asarray(feature, jnp.float32).reshape(3)])               # (9,)

    dens, feat = pl.pallas_call(
        sdf_volume_kernel,
        out_shape=(jax.ShapeDtypeStruct((nr, LANES), jnp.float32),
                   jax.ShapeDtypeStruct((3, nr, LANES), jnp.float32)),
        grid=grid,
        in_specs=[
            pl.BlockSpec(memory_space=pltpu.MemorySpace.SMEM),       # params
            pl.BlockSpec((3, br, LANES), lambda i: (0, i, 0)),       # points
            pl.BlockSpec((br, LANES), lambda i: (i, 0)),             # deltas
        ],
        out_specs=(pl.BlockSpec((br, LANES), lambda i: (i, 0)),      # density
                   pl.BlockSpec((3, br, LANES), lambda i: (0, i, 0))),  # feature
        compiler_params=pltpu.CompilerParams(
            dimension_semantics=("parallel",)),
    )(params, pts, deltas)

    return {"density": dens.reshape(N, 1),        # free reshape back to (N, 1)
            "feature": feat.reshape(3, N).T}      # (N, 3), PyTorch convention


def reference_forward(sample_points, sample_lengths,
                      center, radius, alpha, beta, feature):
    pts = sample_points.reshape(-1, 3)
    depth = sample_lengths[..., 0]
    deltas = jnp.concatenate(
        [depth[:, 1:] - depth[:, :-1],
         1e10 * jnp.ones_like(depth[:, :1])], axis=-1).reshape(-1, 1)
    sd = jnp.linalg.norm(pts - center[None, :], axis=-1, keepdims=True) - radius
    density = jnp.where(sd > 0, 0.5 * jnp.exp(-sd / beta),
                        1.0 - 0.5 * jnp.exp(sd / beta)) * alpha
    base_color = jnp.clip(jnp.abs(pts - center[None, :]), 0.02, 0.98)
    return {"density": -jnp.log(1.0 - density) / deltas,
            "feature": base_color * feature[None, :]}


if __name__ == "__main__":
    key = jax.random.PRNGKey(0)
    k_pts, k_jit = jax.random.split(key)

    R, S = 128, 64                     # N = 8192 points -> Nr = 64 -> grid of 2 blocks
    sample_points = 1.5 * jax.random.normal(k_pts, (R, S, 3), dtype=jnp.float32)

    base_depth = jnp.linspace(0.5, 4.0, S, dtype=jnp.float32)
    jitter = 0.1 * jax.random.uniform(k_jit, (R, 1), dtype=jnp.float32)
    sample_lengths = (base_depth[None, :] + jitter)[..., None]       # (R, S, 1)

    # Deterministic "cfg" parameters (SphereSDF, rainbow=True).
    center = jnp.array([0.0, 0.0, 0.0], dtype=jnp.float32)
    radius = 1.0
    alpha = 0.8                        # kept < 1 so 1 - density stays positive
    beta = 0.05
    feature = jnp.ones((3,), dtype=jnp.float32)   # torch.ones_like(cfg.feature.val)

    out = sdf_volume_forward(sample_points, sample_lengths,
                             center, radius, alpha, beta, feature)
    jax.block_until_ready(out)

    ref = reference_forward(sample_points, sample_lengths,
                            center, radius, alpha, beta, feature)
    assert out["density"].shape == (R * S, 1)
    assert out["feature"].shape == (R * S, 3)
    assert jnp.allclose(out["density"], ref["density"], rtol=1e-4, atol=1e-5)
    assert jnp.allclose(out["feature"], ref["feature"], rtol=1e-5, atol=1e-6)

    print("KERNEL_OK")
</pallas_src>

<mosaic_0001>
module attributes {stable_mosaic.version = 11 : i64} {
  func.func @sdf_volume_kernel(%arg0: i32, %arg1: memref<9xf32, #tpu.memory_space<smem>>, %arg2: memref<3x32x128xf32, #tpu.memory_space<vmem>>, %arg3: memref<32x128xf32, #tpu.memory_space<vmem>>, %arg4: memref<32x128xf32, #tpu.memory_space<vmem>>, %arg5: memref<3x32x128xf32, #tpu.memory_space<vmem>>) attributes {dimension_semantics = [#tpu.dimension_semantics<parallel>], iteration_bounds = array<i64: 2>, scalar_prefetch = 0 : i64, scratch_operands = 0 : i64, tpu.core_type = #tpu.core_type<tc>, window_params = [{transform_indices = @transform_0, window_bounds = array<i64: 9>}, {transform_indices = @transform_1, window_bounds = array<i64: 3, 32, 128>}, {transform_indices = @transform_2, window_bounds = array<i64: 32, 128>}, {transform_indices = @transform_3, window_bounds = array<i64: 32, 128>}, {transform_indices = @transform_4, window_bounds = array<i64: 3, 32, 128>}]} {
    %c0 = arith.constant 0 : index
    %0 = memref.load %arg1[%c0] : memref<9xf32, #tpu.memory_space<smem>>
    %c1 = arith.constant 1 : index
    %1 = memref.load %arg1[%c1] : memref<9xf32, #tpu.memory_space<smem>>
    %c2 = arith.constant 2 : index
    %2 = memref.load %arg1[%c2] : memref<9xf32, #tpu.memory_space<smem>>
    %c0_0 = arith.constant 0 : index
    %c0_1 = arith.constant 0 : index
    %c0_2 = arith.constant 0 : index
    %3 = vector.load %arg2[%c0_0, %c0_1, %c0_2] : memref<3x32x128xf32, #tpu.memory_space<vmem>>, vector<1x32x128xf32>
    %4 = vector.shape_cast %3 : vector<1x32x128xf32> to vector<32x128xf32>
    %c3 = arith.constant 3 : index
    %5 = memref.load %arg1[%c3] : memref<9xf32, #tpu.memory_space<smem>>
    %6 = vector.broadcast %5 : f32 to vector<32x128xf32>
    %7 = arith.subf %4, %6 : vector<32x128xf32>
    %c1_3 = arith.constant 1 : index
    %c0_4 = arith.constant 0 : index
    %c0_5 = arith.constant 0 : index
    %8 = vector.load %arg2[%c1_3, %c0_4, %c0_5] : memref<3x32x128xf32, #tpu.memory_space<vmem>>, vector<1x32x128xf32>
    %9 = vector.shape_cast %8 : vector<1x32x128xf32> to vector<32x128xf32>
    %c4 = arith.constant 4 : index
    %10 = memref.load %arg1[%c4] : memref<9xf32, #tpu.memory_space<smem>>
    %11 = vector.broadcast %10 : f32 to vector<32x128xf32>
    %12 = arith.subf %9, %11 : vector<32x128xf32>
    %c2_6 = arith.constant 2 : index
    %c0_7 = arith.constant 0 : index
    %c0_8 = arith.constant 0 : index
    %13 = vector.load %arg2[%c2_6, %c0_7, %c0_8] : memref<3x32x128xf32, #tpu.memory_space<vmem>>, vector<1x32x128xf32>
    %14 = vector.shape_cast %13 : vector<1x32x128xf32> to vector<32x128xf32>
    %c5 = arith.constant 5 : index
    %15 = memref.load %arg1[%c5] : memref<9xf32, #tpu.memory_space<smem>>
    %16 = vector.broadcast %15 : f32 to vector<32x128xf32>
    %17 = arith.subf %14, %16 : vector<32x128xf32>
    %18 = arith.mulf %7, %7 : vector<32x128xf32>
    %19 = arith.mulf %12, %12 : vector<32x128xf32>
    %20 = arith.addf %18, %19 : vector<32x128xf32>
    %21 = arith.mulf %17, %17 : vector<32x128xf32>
    %22 = arith.addf %20, %21 : vector<32x128xf32>
    %23 = math.sqrt %22 : vector<32x128xf32>
    %24 = vector.broadcast %0 : f32 to vector<32x128xf32>
    %25 = arith.subf %23, %24 : vector<32x128xf32>
    %26 = math.absf %25 : vector<32x128xf32>
    %cst = arith.constant 0.000000e+00 : f32
    %27 = vector.broadcast %cst : f32 to vector<32x128xf32>
    %28 = arith.subf %27, %26 : vector<32x128xf32>
    %29 = vector.broadcast %2 : f32 to vector<32x128xf32>
    %30 = arith.mulf %28, %29 : vector<32x128xf32>
    %31 = math.exp %30 : vector<32x128xf32>
    %cst_9 = arith.constant 0.000000e+00 : f32
    %32 = vector.broadcast %cst_9 : f32 to vector<32x128xf32>
    %33 = arith.cmpf ogt, %25, %32 : vector<32x128xf32>
    %cst_10 = arith.constant 5.000000e-01 : f32
    %34 = vector.broadcast %cst_10 : f32 to vector<32x128xf32>
    %35 = arith.mulf %34, %31 : vector<32x128xf32>
    %cst_11 = arith.constant 5.000000e-01 : f32
    %36 = vector.broadcast %cst_11 : f32 to vector<32x128xf32>
    %37 = arith.mulf %36, %31 : vector<32x128xf32>
    %cst_12 = arith.constant 1.000000e+00 : f32
    %38 = vector.broadcast %cst_12 : f32 to vector<32x128xf32>
    %39 = arith.subf %38, %37 : vector<32x128xf32>
    %40 = arith.select %33, %35, %39 : vector<32x128xi1>, vector<32x128xf32>
    %41 = vector.broadcast %1 : f32 to vector<32x128xf32>
    %42 = arith.mulf %41, %40 : vector<32x128xf32>
    %cst_13 = arith.constant 1.000000e+00 : f32
    %43 = vector.broadcast %cst_13 : f32 to vector<32x128xf32>
    %44 = arith.subf %43, %42 : vector<32x128xf32>
    %45 = math.log %44 : vector<32x128xf32>
    %cst_14 = arith.constant 0.000000e+00 : f32
    %46 = vector.broadcast %cst_14 : f32 to vector<32x128xf32>
    %47 = arith.subf %46, %45 : vector<32x128xf32>
    %c0_15 = arith.constant 0 : index
    %c0_16 = arith.constant 0 : index
    %48 = vector.load %arg3[%c0_15, %c0_16] : memref<32x128xf32, #tpu.memory_space<vmem>>, vector<32x128xf32>
    %49 = tpu.reciprocal %48 : vector<32x128xf32> -> vector<32x128xf32>
    %50 = arith.mulf %47, %49 : vector<32x128xf32>
    %c0_17 = arith.constant 0 : index
    %c0_18 = arith.constant 0 : index
    %51 = vector.load %arg4[%c0_17, %c0_18] : memref<32x128xf32, #tpu.memory_space<vmem>>, vector<32x128xf32>
    tpu.vector_store %arg4[%c0_17, %c0_18], %50 {strides = array<i32>} : memref<32x128xf32, #tpu.memory_space<vmem>>, vector<32x128xf32>,
    %52 = math.absf %7 : vector<32x128xf32>
    %cst_19 = arith.constant 2.000000e-02 : f32
    %cst_20 = arith.constant 9.800000e-01 : f32
    %53 = vector.broadcast %cst_19 : f32 to vector<32x128xf32>
    %54 = arith.maximumf %53, %52 : vector<32x128xf32>
    %55 = vector.broadcast %cst_20 : f32 to vector<32x128xf32>
    %56 = arith.minimumf %55, %54 : vector<32x128xf32>
    %c6 = arith.constant 6 : index
    %57 = memref.load %arg1[%c6] : memref<9xf32, #tpu.memory_space<smem>>
    %58 = vector.broadcast %57 : f32 to vector<32x128xf32>
    %59 = arith.mulf %56, %58 : vector<32x128xf32>
    %c0_21 = arith.constant 0 : index
    %c0_22 = arith.constant 0 : index
    %c0_23 = arith.constant 0 : index
    %60 = vector.load %arg5[%c0_21, %c0_22, %c0_23] : memref<3x32x128xf32, #tpu.memory_space<vmem>>, vector<1x32x128xf32>
    %61 = vector.shape_cast %60 : vector<1x32x128xf32> to vector<32x128xf32>
    %62 = vector.shape_cast %59 : vector<32x128xf32> to vector<1x32x128xf32>
    tpu.vector_store %arg5[%c0_21, %c0_22, %c0_23], %62 {strides = array<i32>} : memref<3x32x128xf32, #tpu.memory_space<vmem>>, vector<1x32x128xf32>,
    %63 = math.absf %12 : vector<32x128xf32>
    %cst_24 = arith.constant 2.000000e-02 : f32
    %cst_25 = arith.constant 9.800000e-01 : f32
    %64 = vector.broadcast %cst_24 : f32 to vector<32x128xf32>
    %65 = arith.maximumf %64, %63 : vector<32x128xf32>
    %66 = vector.broadcast %cst_25 : f32 to vector<32x128xf32>
    %67 = arith.minimumf %66, %65 : vector<32x128xf32>
    %c7 = arith.constant 7 : index
    %68 = memref.load %arg1[%c7] : memref<9xf32, #tpu.memory_space<smem>>
    %69 = vector.broadcast %68 : f32 to vector<32x128xf32>
    %70 = arith.mulf %67, %69 : vector<32x128xf32>
    %c1_26 = arith.constant 1 : index
    %c0_27 = arith.constant 0 : index
    %c0_28 = arith.constant 0 : index
    %71 = vector.load %arg5[%c1_26, %c0_27, %c0_28] : memref<3x32x128xf32, #tpu.memory_space<vmem>>, vector<1x32x128xf32>
    %72 = vector.shape_cast %71 : vector<1x32x128xf32> to vector<32x128xf32>
    %73 = vector.shape_cast %70 : vector<32x128xf32> to vector<1x32x128xf32>
    tpu.vector_store %arg5[%c1_26, %c0_27, %c0_28], %73 {strides = array<i32>} : memref<3x32x128xf32, #tpu.memory_space<vmem>>, vector<1x32x128xf32>,
    %74 = math.absf %17 : vector<32x128xf32>
    %cst_29 = arith.constant 2.000000e-02 : f32
    %cst_30 = arith.constant 9.800000e-01 : f32
    %75 = vector.broadcast %cst_29 : f32 to vector<32x128xf32>
    %76 = arith.maximumf %75, %74 : vector<32x128xf32>
    %77 = vector.broadcast %cst_30 : f32 to vector<32x128xf32>
    %78 = arith.minimumf %77, %76 : vector<32x128xf32>
    %c8 = arith.constant 8 : index
    %79 = memref.load %arg1[%c8] : memref<9xf32, #tpu.memory_space<smem>>
    %80 = vector.broadcast %79 : f32 to vector<32x128xf32>
    %81 = arith.mulf %78, %80 : vector<32x128xf32>
    %c2_31 = arith.constant 2 : index
    %c0_32 = arith.constant 0 : index
    %c0_33 = arith.constant 0 : index
    %82 = vector.load %arg5[%c2_31, %c0_32, %c0_33] : memref<3x32x128xf32, #tpu.memory_space<vmem>>, vector<1x32x128xf32>
    %83 = vector.shape_cast %82 : vector<1x32x128xf32> to vector<32x128xf32>
    %84 = vector.shape_cast %81 : vector<32x128xf32> to vector<1x32x128xf32>
    tpu.vector_store %arg5[%c2_31, %c0_32, %c0_33], %84 {strides = array<i32>} : memref<3x32x128xf32, #tpu.memory_space<vmem>>, vector<1x32x128xf32>,
    return
  }
  func.func @transform_0(%arg0: i32) -> i32 {
    %c0_i32 = arith.constant 0 : i32
    %c0_i32_0 = arith.constant 0 : i32
    return %c0_i32 : i32
  }
  func.func @transform_1(%arg0: i32) -> (i32, i32, i32) {
    %c0_i32 = arith.constant 0 : i32
    %c0_i32_0 = arith.constant 0 : i32
    %c0_i32_1 = arith.constant 0 : i32
    return %c0_i32, %arg0, %c0_i32_0 : i32, i32, i32
  }
  func.func @transform_2(%arg0: i32) -> (i32, i32) {
    %c0_i32 = arith.constant 0 : i32
    %c0_i32_0 = arith.constant 0 : i32
    return %arg0, %c0_i32 : i32, i32
  }
  func.func @transform_3(%arg0: i32) -> (i32, i32) {
    %c0_i32 = arith.constant 0 : i32
    %c0_i32_0 = arith.constant 0 : i32
    return %arg0, %c0_i32 : i32, i32
  }
  func.func @transform_4(%arg0: i32) -> (i32, i32, i32) {
    %c0_i32 = arith.constant 0 : i32
    %c0_i32_0 = arith.constant 0 : i32
    %c0_i32_1 = arith.constant 0 : i32
    return %c0_i32, %arg0, %c0_i32_0 : i32, i32, i32
  }
}

</mosaic_0001>

<llo_original>
// kernel: tpu_custom_call.1
$region0: #{tpu_custom_call.1}
  #allocation0 [shape = 'u32[]', space=smem, size = 0x4, offset = 0x4, fixed_abs, tag = 'smem constant byte address 0x4 - core index']
  #allocation1 [shape = 'u32[144,128]{1,0:T(1,128)}', space=vmem, size = 0x12000, scoped, tag = 'internal scratch']
  #allocation12 [shape = 's32[]', space=sflag, size = 0x4, offset = 0, fixed_abs, tag = 'sflag constant byte address 0x0 - dummy sync flag']
  #allocation14 [shape = 's32[]', space=sflag, size = 0x4, offset = 0, fixed_abs, tag = 'sflag constant byte address 0x0 - dummy sync flag']
  %s0 = inlined_call_operand.hbm [shape: f32[9], index: 0, kind: input, shape index: {}]
  %s1 = inlined_call_operand.hbm [shape: f32[3,64,128], index: 1, kind: input, shape index: {}]
  %s2 = inlined_call_operand.hbm [shape: f32[64,128], index: 2, kind: input, shape index: {}]
  %s3 = inlined_call_operand.hbm [shape: f32[64,128], index: 3, kind: output, shape index: {0}]
  %s4 = inlined_call_operand.hbm [shape: f32[3,64,128], index: 4, kind: output, shape index: {1}]
  %5 = xla_tuple %s3, %s4
  %s6 = sld [smem:[#allocation0]]
  $region65: #{tpu_custom_call.1} parent=0
    _
  %s8 = ssub.s32 1, %s6
  %s9 = scalar_select 0, %s8, %s6
  $region1: #{tpu_custom_call.1} parent=0
    #allocation2 [shape = 'u8[512]{0}', space=smem, size = 0x200, scoped, tag = 'input window, operand 0, single buffered']
    #allocation3 [shape = 's32[2]{0}', space=sflag, size = 0x8, scoped, tag = 'scoped memory for tpu_custom_call.1']
    #allocation4 [shape = 's32[2]{0}', space=sflag, size = 0x8, scoped, tag = 'scoped memory for tpu_custom_call.1']
    #allocation5 [shape = 's32[2]{0}', space=sflag, size = 0x8, scoped, tag = 'scoped memory for tpu_custom_call.1']
    #allocation6 [shape = 'u8[98304]{0}', space=vmem, size = 0x18000, scoped, tag = 'input window, operand 1']
    #allocation7 [shape = 'u8[32768]{0}', space=vmem, size = 0x8000, scoped, tag = 'input window, operand 2']
    #allocation8 [shape = 's32[2]{0}', space=sflag, size = 0x8, scoped, tag = 'scoped memory for tpu_custom_call.1']
    #allocation9 [shape = 'u8[32768]{0}', space=vmem, size = 0x8000, scoped, tag = 'output window, operand 0']
    #allocation10 [shape = 'u8[98304]{0}', space=vmem, size = 0x18000, scoped, tag = 'output window, operand 1']
    #allocation11 [shape = 's32[2]{0}', space=sflag, size = 0x8, scoped, tag = 'scoped memory for tpu_custom_call.1']
    %10 = vsyncpa [#allocation5], 0
    %11 = vsyncpa [#allocation3], 0
    %s12 = scalar_lea.sflag [#allocation3], 1
    %13 = vsyncpa %s12, 0
    %14 = vsyncpa [#allocation8], 0
    %s15 = scalar_lea.sflag [#allocation8], 1
    %16 = vsyncpa %s15, 0
    %17 = vsyncpa [#allocation4], 0
    %s18 = scalar_lea.sflag [#allocation4], 1
    %19 = vsyncpa %s18, 0
    %20 = vsyncpa [#allocation11], 0
    %s21 = scalar_lea.sflag [#allocation11], 1
    %22 = vsyncpa %s21, 0
    loop: start=0, step=1, limit=4
    $region2: #{tpu_custom_call.1} parent=1 // loop_pre_header
      _
    $region3: #{tpu_custom_call.1} parent=1 // loop_header
      %s24 = sphi 0, %s28
      %p25 = scmp.ge.s32.totalorder %s24, 4
      %s32 = sphi 0, %s32
      %s34 = sphi 0, %s32
      %s35 = sphi 0, %s34
      %s49 = sphi 0, %s35
      %s55 = sphi 0, %s57
      %s58 = sphi 0, %s55
      %s59 = sphi 0, %s58
      %s75 = sphi 0, %s59
      %s81 = sphi 0, %s83
      %s84 = sphi 0, %s81
      %s85 = sphi 0, %s84
      %s101 = sphi 0, %s85
      %s107 = sphi 0, %s109
      %s110 = sphi 0, %s107
      %s111 = sphi 0, %s110
      %s127 = sphi 0, %s111
      %s133 = sphi 0, %s135
      %s136 = sphi 0, %s133
      %s137 = sphi 0, %s136
      %s153 = sphi 0, %s137
    $region4: #{tpu_custom_call.1} parent=1 // loop_header_branch
      %27 = sbr.rel (%p25) target = $region8
    $region5: #{tpu_custom_call.1} parent=1 // loop_body
      %s29 = ssub.s32 %s24, 1
      %s30 = ssub.s32 %s24, 2
      %s31 = sadd.s32 %s24, 1
      %s33 = sadd.s32 %s32, 1
      %p36 = scmp.eq.s32.totalorder %s24, 1
      %p37 = scmp.ne.s32.totalorder %s32, %s34
      %p38 = scmp.eq.s32.totalorder %s24, 0
      %p39 = por %p37, %p38
      %p40 = scmp.ne.s32.totalorder %s32, %s34
      %p41 = scmp.eq.s32.totalorder %s29, 1
      %p42 = por %p40, %p41
      %p43 = scmp.ne.s32.totalorder %s34, %s35
      %p44 = scmp.eq.s32.totalorder %s29, 0
      %p45 = por %p43, %p44
      %p46 = scmp.ne.s32.totalorder %s34, %s35
      %p47 = scmp.eq.s32.totalorder %s30, 1
      %p48 = por %p46, %p47
      %p50 = scmp.ne.s32.totalorder %s35, %s49
      %p51 = scmp.eq.s32.totalorder %s30, 0
      %p52 = por %p50, %p51
      %s53 = ssub.s32 %s24, %s31
      %p54 = scmp.eq.s32.totalorder %s53, 0
      %s56 = sadd.s32 %s55, 1
      %s57 = scalar_select %p54, %s55, %s56
      %p60 = pneg %p54
      %p61 = scmp.eq.s32.totalorder %s24, 1
      %p62 = por %p60, %p61
      %p63 = scmp.ne.s32.totalorder %s55, %s58
      %p64 = scmp.eq.s32.totalorder %s24, 0
      %p65 = por %p63, %p64
      %p66 = scmp.ne.s32.totalorder %s55, %s58
      %p67 = scmp.eq.s32.totalorder %s29, 1
      %p68 = por %p66, %p67
      %p69 = scmp.ne.s32.totalorder %s58, %s59
      %p70 = scmp.eq.s32.totalorder %s29, 0
      %p71 = por %p69, %p70
      %p72 = scmp.ne.s32.totalorder %s58, %s59
      %p73 = scmp.eq.s32.totalorder %s30, 1
      %p74 = por %p72, %p73
      %p76 = scmp.ne.s32.totalorder %s59, %s75
      %p77 = scmp.eq.s32.totalorder %s30, 0
      %p78 = por %p76, %p77
      %s79 = ssub.s32 %s24, %s31
      %p80 = scmp.eq.s32.totalorder %s79, 0
      %s82 = sadd.s32 %s81, 1
      %s83 = scalar_select %p80, %s81, %s82
      %p86 = pneg %p80
      %p87 = scmp.eq.s32.totalorder %s24, 1
      %p88 = por %p86, %p87
      %p89 = scmp.ne.s32.totalorder %s81, %s84
      %p90 = scmp.eq.s32.totalorder %s24, 0
      %p91 = por %p89, %p90
      %p92 = scmp.ne.s32.totalorder %s81, %s84
      %p93 = scmp.eq.s32.totalorder %s29, 1
      %p94 = por %p92, %p93
      %p95 = scmp.ne.s32.totalorder %s84, %s85
      %p96 = scmp.eq.s32.totalorder %s29, 0
      %p97 = por %p95, %p96
      %p98 = scmp.ne.s32.totalorder %s84, %s85
      %p99 = scmp.eq.s32.totalorder %s30, 1
      %p100 = por %p98, %p99
      %p102 = scmp.ne.s32.totalorder %s85, %s101
      %p103 = scmp.eq.s32.totalorder %s30, 0
      %p104 = por %p102, %p103
      %s105 = ssub.s32 %s24, %s31
      %p106 = scmp.eq.s32.totalorder %s105, 0
      %s108 = sadd.s32 %s107, 1
      %s109 = scalar_select %p106, %s107, %s108
      %p112 = pneg %p106
      %p113 = scmp.eq.s32.totalorder %s24, 1
      %p114 = por %p112, %p113
      %p115 = scmp.ne.s32.totalorder %s107, %s110
      %p116 = scmp.eq.s32.totalorder %s24, 0
      %p117 = por %p115, %p116
      %p118 = scmp.ne.s32.totalorder %s107, %s110
      %p119 = scmp.eq.s32.totalorder %s29, 1
      %p120 = por %p118, %p119
      %p121 = scmp.ne.s32.totalorder %s110, %s111
      %p122 = scmp.eq.s32.totalorder %s29, 0
      %p123 = por %p121, %p122
      %p124 = scmp.ne.s32.totalorder %s110, %s111
      %p125 = scmp.eq.s32.totalorder %s30, 1
      %p126 = por %p124, %p125
      %p128 = scmp.ne.s32.totalorder %s111, %s127
      %p129 = scmp.eq.s32.totalorder %s30, 0
      %p130 = por %p128, %p129
      %s131 = ssub.s32 %s24, %s31
      %p132 = scmp.eq.s32.totalorder %s131, 0
      %s134 = sadd.s32 %s133, 1
      %s135 = scalar_select %p132, %s133, %s134
      %p138 = pneg %p132
      %p139 = scmp.eq.s32.totalorder %s24, 1
      %p140 = por %p138, %p139
      %p141 = scmp.ne.s32.totalorder %s133, %s136
      %p142 = scmp.eq.s32.totalorder %s24, 0
      %p143 = por %p141, %p142
      %p144 = scmp.ne.s32.totalorder %s133, %s136
      %p145 = scmp.eq.s32.totalorder %s29, 1
      %p146 = por %p144, %p145
      %p147 = scmp.ne.s32.totalorder %s136, %s137
      %p148 = scmp.eq.s32.totalorder %s29, 0
      %p149 = por %p147, %p148
      %p150 = scmp.ne.s32.totalorder %s136, %s137
      %p151 = scmp.eq.s32.totalorder %s30, 1
      %p152 = por %p150, %p151
      %p154 = scmp.ne.s32.totalorder %s137, %s153
      %p155 = scmp.eq.s32.totalorder %s30, 0
      %p156 = por %p154, %p155
      %p157 = scmp.le.s32.totalorder 1, %s24
      %p158 = scmp.lt.s32.totalorder %s24, 3
      %p159 = pnand %p157, %p158
      %p160 = pneg %p159
      // Predicated region
      $region9: #{tpu_custom_call.1} parent=5 // pred_check
        _
      $region10: #{tpu_custom_call.1} parent=5 // pred_check_branch
        %162 = sbr.rel (%p159) target = $region12
      $region11: #{tpu_custom_call.1} parent=5 // pred_region
        %s163 = ssub.s32 %s24, 1
        // Predicated region
        $region13: #{tpu_custom_call.1} parent=11 // pred_check
          %p164 = pneg %p45
        $region14: #{tpu_custom_call.1} parent=11 // pred_check_branch
          %166 = sbr.rel (%p164) target = $region16
        $region15: #{tpu_custom_call.1} parent=11 // pred_region
          %s168 = ssub.s32 16, 16
          %169 = vsyncadd [#allocation5], %s168
          %172 = dma.hbm_to_smem %s0, 16, [#allocation2], [#allocation5]
        $region16: #{tpu_custom_call.1} parent=11 // pred_fallthru
          _
      $region12: #{tpu_custom_call.1} parent=5 // pred_fallthru
        _
      %p173 = scmp.lt.s32.totalorder %s24, 2
      // Predicated region
      $region17: #{tpu_custom_call.1} parent=5 // pred_check
        %p174 = pneg %p173
      $region18: #{tpu_custom_call.1} parent=5 // pred_check_branch
        %176 = sbr.rel (%p174) target = $region20
      $region19: #{tpu_custom_call.1} parent=5 // pred_region
        // Predicated region
        $region21: #{tpu_custom_call.1} parent=19 // pred_check
          %p177 = pneg %p65
        $region22: #{tpu_custom_call.1} parent=19 // pred_check_branch
          %179 = sbr.rel (%p177) target = $region24
        $region23: #{tpu_custom_call.1} parent=19 // pred_region
          #allocation13 [shape = 'u32[6]{0}', space=smem, size = 0x18, scoped, tag = 'DMA stride descriptor']
          %s180 = sand.u32 %s55, 1
          %s181 = scalar_lea.sflag [#allocation3], %s180
          %s182 = sand.u32 %s55, 1
          %s183 = smul.addr %s182, 96
          %s184 = scalar_lea.vmem [#allocation6], %s183
          %s185 = smul.u32 4, %s24
          %s187 = ssub.s32 1536, 1536
          %188 = vsyncadd %s181, %s187
          %s189 = smul.addr %s185, 128
          %s190 = scalar_lea.hbm %s1, %s189
          %s192 = sshll.u32 1, 14
          %s193 = sxor.u32 4294967295, %s192
          %s195 = sld [smem:[#allocation0]]
          %s196 = sadd.s32 2, %s195
          %s198 = sshll.u32 7, 26
          %s199 = sxor.u32 4294967295, %s198
          %s200 = sand.u32 0, %s199
          %s201 = sshll.u32 %s196, 26
          %s202 = sor.u32 %s200, %s201
          %s203 = sshll.u32 %s184, 4
          %s204 = int_to_ptr.vmem [resolvable:$true] %s203
          %210 = sst [smem:[#allocation13]] 1024
          %s211 = scalar_lea.smem [#allocation13], 1
          %212 = sst [smem:[%s211]] 512
          %s213 = scalar_lea.smem [#allocation13], 2
          %214 = sst [smem:[%s213]] 4
          %s215 = scalar_lea.smem [#allocation13], 3
          %216 = sst [smem:[%s215]] 128
          %s217 = scalar_lea.smem [#allocation13], 4
          %218 = sst [smem:[%s217]] 128
          %s219 = scalar_lea.smem [#allocation13], 5
          %220 = sst [smem:[%s219]] 8
          %222 = dma.general %s190, 1536, %s204, %s181, [#allocation12], [#allocation13], %s202, 0
        $region24: #{tpu_custom_call.1} parent=19 // pred_fallthru
          _
        // Predicated region
        $region25: #{tpu_custom_call.1} parent=19 // pred_check
          %p223 = pneg %p91
        $region26: #{tpu_custom_call.1} parent=19 // pred_check_branch
          %225 = sbr.rel (%p223) target = $region28
        $region27: #{tpu_custom_call.1} parent=19 // pred_region
          %s226 = sand.u32 %s81, 1
          %s227 = scalar_lea.sflag [#allocation8], %s226
          %s228 = sand.u32 %s81, 1
          %s229 = smul.addr %s228, 32
          %s230 = scalar_lea.vmem [#allocation7], %s229
          %s231 = smul.u32 4, %s24
          %s233 = ssub.s32 512, 512
          %234 = vsyncadd %s227, %s233
          %s235 = smul.addr %s231, 128
          %s236 = scalar_lea.hbm %s2, %s235
          %s237 = sshll.u32 %s230, 4
          %s238 = int_to_ptr.vmem [resolvable:$true] %s237
          %243 = dma.hbm_to_vmem [thread:$0]  %s236, 512, %s238, %s227, 128, 128, 8
        $region28: #{tpu_custom_call.1} parent=19 // pred_fallthru
          _
      $region20: #{tpu_custom_call.1} parent=5 // pred_fallthru
        _
      %p244 = scmp.le.s32.totalorder 1, %s24
      %p245 = scmp.lt.s32.totalorder %s24, 3
      %p246 = pnand %p244, %p245
      %p247 = pneg %p246
      // Predicated region
      $region29: #{tpu_custom_call.1} parent=5 // pred_check
        _
      $region30: #{tpu_custom_call.1} parent=5 // pred_check_branch
        %249 = sbr.rel (%p246) target = $region32
      $region31: #{tpu_custom_call.1} parent=5 // pred_region
        %s250 = ssub.s32 %s24, 1
        // Predicated region
        $region33: #{tpu_custom_call.1} parent=31 // pred_check
          %p251 = pneg %p45
        $region34: #{tpu_custom_call.1} parent=31 // pred_check_branch
          %253 = sbr.rel (%p251) target = $region36
        $region35: #{tpu_custom_call.1} parent=31 // pred_region
          %254 = dma.done [#allocation5], 16
        $region36: #{tpu_custom_call.1} parent=31 // pred_fallthru
          _
        %s255 = sand.u32 %s58, 1
        %s256 = scalar_lea.sflag [#allocation3], %s255
        %s257 = sand.u32 %s58, 1
        %s258 = smul.addr %s257, 96
        %s259 = scalar_lea.vmem [#allocation6], %s258
        // Predicated region
        $region37: #{tpu_custom_call.1} parent=31 // pred_check
          %p260 = pneg %p71
        $region38: #{tpu_custom_call.1} parent=31 // pred_check_branch
          %262 = sbr.rel (%p260) target = $region40
        $region39: #{tpu_custom_call.1} parent=31 // pred_region
          %263 = dma.done %s256, 1536
        $region40: #{tpu_custom_call.1} parent=31 // pred_fallthru
          _
        %s264 = sand.u32 %s84, 1
        %s265 = scalar_lea.sflag [#allocation8], %s264
        %s266 = sand.u32 %s84, 1
        %s267 = smul.addr %s266, 32
        %s268 = scalar_lea.vmem [#allocation7], %s267
        // Predicated region
        $region41: #{tpu_custom_call.1} parent=31 // pred_check
          %p269 = pneg %p97
        $region42: #{tpu_custom_call.1} parent=31 // pred_check_branch
          %271 = sbr.rel (%p269) target = $region44
        $region43: #{tpu_custom_call.1} parent=31 // pred_region
          %272 = dma.done %s265, 512
        $region44: #{tpu_custom_call.1} parent=31 // pred_fallthru
          _
        %273 = sfence
        %p274 = pneg %p45
        %p275 = pneg %p42
        %s276 = sand.u32 %s58, 1
        %s277 = scalar_lea.sflag [#allocation3], %s276
        %s278 = sand.u32 %s58, 1
        %s279 = smul.addr %s278, 96
        %s280 = scalar_lea.vmem [#allocation6], %s279
        %p281 = pneg %p71
        %p282 = pneg %p68
        %s283 = sand.u32 %s84, 1
        %s284 = scalar_lea.sflag [#allocation8], %s283
        %s285 = sand.u32 %s84, 1
        %s286 = smul.addr %s285, 32
        %s287 = scalar_lea.vmem [#allocation7], %s286
        %p288 = pneg %p97
        %p289 = pneg %p94
        %p290 = pneg %p123
        %p291 = pneg %p120
        %s292 = sand.u32 %s110, 1
        %s293 = scalar_lea.sflag [#allocation4], %s292
        %s294 = sand.u32 %s110, 1
        %s295 = smul.addr %s294, 32
        %s296 = scalar_lea.vmem [#allocation9], %s295
        %p297 = pneg %p149
        %p298 = pneg %p146
        %s299 = sand.u32 %s136, 1
        %s300 = scalar_lea.sflag [#allocation11], %s299
        %s301 = sand.u32 %s136, 1
        %s302 = smul.addr %s301, 96
        %s303 = scalar_lea.vmem [#allocation10], %s302
        %s304 = smul.u32 4, %s29
        %s305 = smul.u32 4, %s29
        %s306 = smul.u32 4, %s29
        %s307 = smul.u32 4, %s29
        %s308 = sld [smem:[#allocation2]]
        %s309 = sld [smem:[#allocation2 + $0x1]]
        %s310 = sld [smem:[#allocation2 + $0x2]]
        %v311 = vld [vmem:[%s259] sm:$0xff]
        %v312 = vld [vmem:[%s259 + $0x8] sm:$0xff]
        %v313 = vld [vmem:[%s259 + $0x10] sm:$0xff]
        %v314 = vld [vmem:[%s259 + $0x18] sm:$0xff]
        %s315 = sld [smem:[#allocation2 + $0x3]]
        %v316 = vstv %s315
        %v317 = vsub.f32 %v311, %v316
        %v318 = vsub.f32 %v312, %v316
        %v319 = vsub.f32 %v313, %v316
        %v320 = vsub.f32 %v314, %v316
        %s321 = scalar_lea.vmem %s259, 32 [#allocation6]
        %v322 = vld [vmem:[%s321] sm:$0xff]
        %v323 = vld [vmem:[%s321 + $0x8] sm:$0xff]
        %v324 = vld [vmem:[%s321 + $0x10] sm:$0xff]
        %v325 = vld [vmem:[%s321 + $0x18] sm:$0xff]
        %s326 = sld [smem:[#allocation2 + $0x4]]
        %v327 = vstv %s326
        %v328 = vsub.f32 %v322, %v327
        %v329 = vsub.f32 %v323, %v327
        %v330 = vsub.f32 %v324, %v327
        %v331 = vsub.f32 %v325, %v327
        %s332 = scalar_lea.vmem %s259, 64 [#allocation6]
        %v333 = vld [vmem:[%s332] sm:$0xff]
        %v334 = vld [vmem:[%s332 + $0x8] sm:$0xff]
        %v335 = vld [vmem:[%s332 + $0x10] sm:$0xff]
        %v336 = vld [vmem:[%s332 + $0x18] sm:$0xff]
        %s337 = sld [smem:[#allocation2 + $0x5]]
        %v338 = vstv %s337
        %v339 = vsub.f32 %v333, %v338
        %v340 = vsub.f32 %v334, %v338
        %v341 = vsub.f32 %v335, %v338
        %v342 = vsub.f32 %v336, %v338
        %v343 = vmul.f32 %v317, %v317
        %v344 = vmul.f32 %v318, %v318
        %v345 = vmul.f32 %v319, %v319
        %v346 = vmul.f32 %v320, %v320
        %v347 = vmul.f32 %v328, %v328
        %v348 = vmul.f32 %v329, %v329
        %v349 = vmul.f32 %v330, %v330
        %v350 = vmul.f32 %v331, %v331
        %v351 = vadd.f32 %v343, %v347
        %v352 = vadd.f32 %v344, %v348
        %v353 = vadd.f32 %v345, %v349
        %v354 = vadd.f32 %v346, %v350
        %v355 = vmul.f32 %v339, %v339
        %v356 = vmul.f32 %v340, %v340
        %v357 = vmul.f32 %v341, %v341
        %v358 = vmul.f32 %v342, %v342
        %v359 = vadd.f32 %v351, %v355
        %v360 = vadd.f32 %v352, %v356
        %v361 = vadd.f32 %v353, %v357
        %v362 = vadd.f32 %v354, %v358
        %v363 = vrsqrt.pop %v359
        %v364 = vmul.f32 %v359, %v363
        %vm365 = vcmp.eq.f32.partialorder %v359, inf
        %v366 = vsel %vm365, %v359, %v364
        %vm367 = vcmp.eq.f32.partialorder %v359, 0.0
        %v368 = vand.u32 %v359, 2147483648
        %v369 = vsel %vm367, %v368, %v366
        %v370 = vrsqrt.pop %v360
        %v371 = vmul.f32 %v360, %v370
        %vm372 = vcmp.eq.f32.partialorder %v360, inf
        %v373 = vsel %vm372, %v360, %v371
        %vm374 = vcmp.eq.f32.partialorder %v360, 0.0
        %v375 = vand.u32 %v360, 2147483648
        %v376 = vsel %vm374, %v375, %v373
        %v377 = vrsqrt.pop %v361
        %v378 = vmul.f32 %v361, %v377
        %vm379 = vcmp.eq.f32.partialorder %v361, inf
        %v380 = vsel %vm379, %v361, %v378
        %vm381 = vcmp.eq.f32.partialorder %v361, 0.0
        %v382 = vand.u32 %v361, 2147483648
        %v383 = vsel %vm381, %v382, %v380
        %v384 = vrsqrt.pop %v362
        %v385 = vmul.f32 %v362, %v384
        %vm386 = vcmp.eq.f32.partialorder %v362, inf
        %v387 = vsel %vm386, %v362, %v385
        %vm388 = vcmp.eq.f32.partialorder %v362, 0.0
        %v389 = vand.u32 %v362, 2147483648
        %v390 = vsel %vm388, %v389, %v387
        %v391 = vstv %s308
        %v392 = vsub.f32 %v369, %v391
        %v393 = vsub.f32 %v376, %v391
        %v394 = vsub.f32 %v383, %v391
        %v395 = vsub.f32 %v390, %v391
        %v396 = vand.u32 2147483647, %v392
        %v397 = vand.u32 2147483647, %v393
        %v398 = vand.u32 2147483647, %v394
        %v399 = vand.u32 2147483647, %v395
        %v400 = vsub.f32 0.0, %v396
        %v401 = vsub.f32 0.0, %v397
        %v402 = vsub.f32 0.0, %v398
        %v403 = vsub.f32 0.0, %v399
        %v404 = vstv %s310
        %v405 = vmul.f32 %v400, %v404
        %v406 = vmul.f32 %v401, %v404
        %v407 = vmul.f32 %v402, %v404
        %v408 = vmul.f32 %v403, %v404
        %v409 = vmul.f32 %v405, 1.442695
        %v410 = vpow.pop %v409
        %v411 = vmul.f32 %v406, 1.442695
        %v412 = vpow.pop %v411
        %v413 = vmul.f32 %v407, 1.442695
        %v414 = vpow.pop %v413
        %v415 = vmul.f32 %v408, 1.442695
        %v416 = vpow.pop %v415
        %vm417 = vcmp.gt.f32.partialorder %v392, 0.0
        %vm418 = vcmp.gt.f32.partialorder %v393, 0.0
        %vm419 = vcmp.gt.f32.partialorder %v394, 0.0
        %vm420 = vcmp.gt.f32.partialorder %v395, 0.0
        %v421 = vmul.f32 %v410, 0.5
        %v422 = vmul.f32 %v412, 0.5
        %v423 = vmul.f32 %v414, 0.5
        %v424 = vmul.f32 %v416, 0.5
        %v425 = vsub.f32 1.0, %v421
        %v426 = vsub.f32 1.0, %v422
        %v427 = vsub.f32 1.0, %v423
        %v428 = vsub.f32 1.0, %v424
        %v429 = vsel %vm417, %v421, %v425
        %v430 = vsel %vm418, %v422, %v426
        %v431 = vsel %vm419, %v423, %v427
        %v432 = vsel %vm420, %v424, %v428
        %v433 = vstv %s309
        %v434 = vmul.f32 %v433, %v429
        %v435 = vmul.f32 %v433, %v430
        %v436 = vmul.f32 %v433, %v431
        %v437 = vmul.f32 %v433, %v432
        %v438 = vsub.f32 1.0, %v434
        %v439 = vsub.f32 1.0, %v435
        %v440 = vsub.f32 1.0, %v436
        %v441 = vsub.f32 1.0, %v437
        %v442 = vlog2.pop %v438
        %v443 = vmul.f32 %v442, 0.6931472
        %v444 = vlog2.pop %v439
        %v445 = vmul.f32 %v444, 0.6931472
        %v446 = vlog2.pop %v440
        %v447 = vmul.f32 %v446, 0.6931472
        %v448 = vlog2.pop %v441
        %v449 = vmul.f32 %v448, 0.6931472
        %v450 = vsub.f32 0.0, %v443
        %v451 = vsub.f32 0.0, %v445
        %v452 = vsub.f32 0.0, %v447
        %v453 = vsub.f32 0.0, %v449
        %v454 = vld [vmem:[%s268] sm:$0xff]
        %v455 = vld [vmem:[%s268 + $0x8] sm:$0xff]
        %v456 = vld [vmem:[%s268 + $0x10] sm:$0xff]
        %v457 = vld [vmem:[%s268 + $0x18] sm:$0xff]
        %v458 = vrcp.pop %v454
        %v459 = vrcp.pop %v455
        %v460 = vrcp.pop %v456
        %v461 = vrcp.pop %v457
        %v462 = vmul.f32 %v450, %v458
        %v463 = vmul.f32 %v451, %v459
        %v464 = vmul.f32 %v452, %v460
        %v465 = vmul.f32 %v453, %v461
        %466 = vst [vmem:[%s296] sm:$0xff] %v462
        %467 = vst [vmem:[%s296 + $0x8] sm:$0xff] %v463
        %468 = vst [vmem:[%s296 + $0x10] sm:$0xff] %v464
        %469 = vst [vmem:[%s296 + $0x18] sm:$0xff] %v465
        %v470 = vand.u32 2147483647, %v317
        %v471 = vand.u32 2147483647, %v318
        %v472 = vand.u32 2147483647, %v319
        %v473 = vand.u32 2147483647, %v320
        %v474 = vmax.f32 %v470, 0.02
        %v475 = vmax.f32 %v471, 0.02
        %v476 = vmax.f32 %v472, 0.02
        %v477 = vmax.f32 %v473, 0.02
        %v478 = vmin.f32 %v474, 0.98
        %v479 = vmin.f32 %v475, 0.98
        %v480 = vmin.f32 %v476, 0.98
        %v481 = vmin.f32 %v477, 0.98
        %s482 = sld [smem:[#allocation2 + $0x6]]
        %v483 = vstv %s482
        %v484 = vmul.f32 %v478, %v483
        %v485 = vmul.f32 %v479, %v483
        %v486 = vmul.f32 %v480, %v483
        %v487 = vmul.f32 %v481, %v483
        %488 = vst [vmem:[%s303] sm:$0xff] %v484
        %489 = vst [vmem:[%s303 + $0x8] sm:$0xff] %v485
        %490 = vst [vmem:[%s303 + $0x10] sm:$0xff] %v486
        %491 = vst [vmem:[%s303 + $0x18] sm:$0xff] %v487
        %v492 = vand.u32 2147483647, %v328
        %v493 = vand.u32 2147483647, %v329
        %v494 = vand.u32 2147483647, %v330
        %v495 = vand.u32 2147483647, %v331
        %v496 = vmax.f32 %v492, 0.02
        %v497 = vmax.f32 %v493, 0.02
        %v498 = vmax.f32 %v494, 0.02
        %v499 = vmax.f32 %v495, 0.02
        %v500 = vmin.f32 %v496, 0.98
        %v501 = vmin.f32 %v497, 0.98
        %v502 = vmin.f32 %v498, 0.98
        %v503 = vmin.f32 %v499, 0.98
        %s504 = sld [smem:[#allocation2 + $0x7]]
        %v505 = vstv %s504
        %v506 = vmul.f32 %v500, %v505
        %v507 = vmul.f32 %v501, %v505
        %v508 = vmul.f32 %v502, %v505
        %v509 = vmul.f32 %v503, %v505
        %s510 = scalar_lea.vmem %s303, 32 [#allocation10]
        %511 = vst [vmem:[%s510] sm:$0xff] %v506
        %512 = vst [vmem:[%s510 + $0x8] sm:$0xff] %v507
        %513 = vst [vmem:[%s510 + $0x10] sm:$0xff] %v508
        %514 = vst [vmem:[%s510 + $0x18] sm:$0xff] %v509
        %v515 = vand.u32 2147483647, %v339
        %v516 = vand.u32 2147483647, %v340
        %v517 = vand.u32 2147483647, %v341
        %v518 = vand.u32 2147483647, %v342
        %v519 = vmax.f32 %v515, 0.02
        %v520 = vmax.f32 %v516, 0.02
        %v521 = vmax.f32 %v517, 0.02
        %v522 = vmax.f32 %v518, 0.02
        %v523 = vmin.f32 %v519, 0.98
        %v524 = vmin.f32 %v520, 0.98
        %v525 = vmin.f32 %v521, 0.98
        %v526 = vmin.f32 %v522, 0.98
        %s527 = sld [smem:[#allocation2 + $0x8]]
        %v528 = vstv %s527
        %v529 = vmul.f32 %v523, %v528
        %v530 = vmul.f32 %v524, %v528
        %v531 = vmul.f32 %v525, %v528
        %v532 = vmul.f32 %v526, %v528
        %s533 = scalar_lea.vmem %s303, 64 [#allocation10]
        %534 = vst [vmem:[%s533] sm:$0xff] %v529
        %535 = vst [vmem:[%s533 + $0x8] sm:$0xff] %v530
        %536 = vst [vmem:[%s533 + $0x10] sm:$0xff] %v531
        %537 = vst [vmem:[%s533 + $0x18] sm:$0xff] %v532
        %s538 = sand.u32 %s110, 1
        %s539 = scalar_lea.sflag [#allocation4], %s538
        %s540 = sand.u32 %s110, 1
        %s541 = smul.addr %s540, 32
        %s542 = scalar_lea.vmem [#allocation9], %s541
        %s543 = sand.u32 %s136, 1
        %s544 = scalar_lea.sflag [#allocation11], %s543
        %s545 = sand.u32 %s136, 1
        %s546 = smul.addr %s545, 96
        %s547 = scalar_lea.vmem [#allocation10], %s546
        // Predicated region
        $region45: #{tpu_custom_call.1} parent=31 // pred_check
          %p548 = pneg %p120
        $region46: #{tpu_custom_call.1} parent=31 // pred_check_branch
          %550 = sbr.rel (%p548) target = $region48
        $region47: #{tpu_custom_call.1} parent=31 // pred_region
          %s551 = smul.u32 4, %s29
          %s553 = ssub.s32 512, 512
          %554 = vsyncadd %s539, %s553
          %s555 = smul.addr %s551, 128
          %s556 = scalar_lea.hbm %s3, %s555
          %s557 = sshll.u32 %s542, 4
          %s558 = int_to_ptr.vmem [resolvable:$true] %s557
          %563 = dma.vmem_to_hbm [thread:$0]  %s558, 512, %s556, %s539, 128, 128, 8
        $region48: #{tpu_custom_call.1} parent=31 // pred_fallthru
          _
        // Predicated region
        $region49: #{tpu_custom_call.1} parent=31 // pred_check
          %p564 = pneg %p146
        $region50: #{tpu_custom_call.1} parent=31 // pred_check_branch
          %566 = sbr.rel (%p564) target = $region52
        $region51: #{tpu_custom_call.1} parent=31 // pred_region
          #allocation15 [shape = 'u32[6]{0}', space=smem, size = 0x18, scoped, tag = 'DMA stride descriptor']
          %s567 = smul.u32 4, %s29
          %s569 = ssub.s32 1536, 1536
          %570 = vsyncadd %s544, %s569
          %s571 = smul.addr %s567, 128
          %s572 = scalar_lea.hbm %s4, %s571
          %s574 = sshll.u32 1, 14
          %s575 = sxor.u32 4294967295, %s574
          %s578 = sshll.u32 7, 18
          %s579 = sxor.u32 4294967295, %s578
          %s580 = sand.u32 0, %s579
          %s582 = sor.u32 %s580, 0
          %s584 = sshll.u32 3, 24
          %s585 = sxor.u32 4294967295, %s584
          %s586 = sand.u32 %s582, %s585
          %s588 = sor.u32 %s586, 0
          %s589 = sshll.u32 %s547, 4
          %s590 = int_to_ptr.vmem [resolvable:$true] %s589
          %596 = sst [smem:[#allocation15]] 512
          %s597 = scalar_lea.smem [#allocation15], 1
          %598 = sst [smem:[%s597]] 1024
          %s599 = scalar_lea.smem [#allocation15], 2
          %600 = sst [smem:[%s599]] 4
          %s601 = scalar_lea.smem [#allocation15], 3
          %602 = sst [smem:[%s601]] 128
          %s603 = scalar_lea.smem [#allocation15], 4
          %604 = sst [smem:[%s603]] 128
          %s605 = scalar_lea.smem [#allocation15], 5
          %606 = sst [smem:[%s605]] 8
          %608 = dma.general %s590, 1536, %s572, %s544, [#allocation14], [#allocation15], %s588, 0
        $region52: #{tpu_custom_call.1} parent=31 // pred_fallthru
          _
      $region32: #{tpu_custom_call.1} parent=5 // pred_fallthru
        _
      %p609 = scmp.le.s32.totalorder 2, %s24
      // Predicated region
      $region53: #{tpu_custom_call.1} parent=5 // pred_check
        %p610 = pneg %p609
      $region54: #{tpu_custom_call.1} parent=5 // pred_check_branch
        %612 = sbr.rel (%p610) target = $region56
      $region55: #{tpu_custom_call.1} parent=5 // pred_region
        %s613 = ssub.s32 %s24, 2
        // Predicated region
        $region57: #{tpu_custom_call.1} parent=55 // pred_check
          %p614 = pneg %p126
        $region58: #{tpu_custom_call.1} parent=55 // pred_check_branch
          %616 = sbr.rel (%p614) target = $region60
        $region59: #{tpu_custom_call.1} parent=55 // pred_region
          %s617 = sand.u32 %s111, 1
          %s618 = scalar_lea.sflag [#allocation4], %s617
          %s619 = sand.u32 %s111, 1
          %s620 = smul.addr %s619, 32
          %s621 = scalar_lea.vmem [#allocation9], %s620
          %622 = dma.done %s618, 512
        $region60: #{tpu_custom_call.1} parent=55 // pred_fallthru
          _
        // Predicated region
        $region61: #{tpu_custom_call.1} parent=55 // pred_check
          %p623 = pneg %p152
        $region62: #{tpu_custom_call.1} parent=55 // pred_check_branch
          %625 = sbr.rel (%p623) target = $region64
        $region63: #{tpu_custom_call.1} parent=55 // pred_region
          %s626 = sand.u32 %s137, 1
          %s627 = scalar_lea.sflag [#allocation11], %s626
          %s628 = sand.u32 %s137, 1
          %s629 = smul.addr %s628, 96
          %s630 = scalar_lea.vmem [#allocation10], %s629
          %631 = dma.done %s627, 1536
        $region64: #{tpu_custom_call.1} parent=55 // pred_fallthru
          _
      $region56: #{tpu_custom_call.1} parent=5 // pred_fallthru
        _
    $region6: #{tpu_custom_call.1} parent=1 // loop_footer
      %s28 = sadd.s32 1, %s24
    $region7: #{tpu_custom_call.1} parent=1 // loop_footer_branch
      %23 = sbr.rel target = $region3
    $region8: #{tpu_custom_call.1} parent=1 // loop_exit
      _
    %632 = vsyncpa [#allocation3], 1
    %s633 = scalar_lea.sflag [#allocation3], 1
    %634 = vsyncpa %s633, 1
    %635 = vsyncpa [#allocation8], 1
    %s636 = scalar_lea.sflag [#allocation8], 1
    %637 = vsyncpa %s636, 1
    %638 = vsyncpa [#allocation4], 1
    %s639 = scalar_lea.sflag [#allocation4], 1
    %640 = vsyncpa %s639, 1
    %641 = vsyncpa [#allocation11], 1
    %s642 = scalar_lea.sflag [#allocation11], 1
    %643 = vsyncpa %s642, 1
    %644 = vsyncpa [#allocation5], 1
    %s645 = scalar_lea.sflag [#allocation5], 1
    %646 = vsyncpa %s645, 1

</llo_original>
